<compile_context>
chip_gen: v6e
topology: v6e:2x2x1
jax: 0.10.0
libtpu: 0.0.40
codegen_flags: <defaults>
</compile_context>

<pallas_src>
import functools
import math

import jax
import jax.numpy as jnp
from jax.experimental import pallas as pl
from jax.experimental.pallas import tpu as pltpu


def _weight_norm(v, g):
    """PyTorch nn.utils.weight_norm (dim=0): w[o] = g[o] * v[o] / ||v[o]||."""
    norm = jnp.sqrt(jnp.sum(v * v, axis=(1, 2), keepdims=True))
    return (g[:, None, None] / norm) * v


# ---------------------------------------------------------------------------
# Fused per-batch-element kernel: conv1 -> relu -> conv2 -> relu -> +residual.
# Everything stays in the native (C, L) layout: L on lanes, no transposes,
# causal left-pad built in registers, one MXU matmul per conv.
# ---------------------------------------------------------------------------
def _tcn_block_kernel(*refs, kernel_size, dilation, pad, c_in, c_out, seq_len,
                      has_res_conv):
    if has_res_conv:
        x_ref, w1_ref, b1_ref, w2_ref, b2_ref, wr_ref, br_ref, o_ref = refs
    else:
        x_ref, w1_ref, b1_ref, w2_ref, b2_ref, o_ref = refs

    L = seq_len
    xb = x_ref[0]                                         # (C_in, L)

    def dilated_conv(h, w_mat, n_ch):
        # Causal left-pad halo kept in registers -- no scratch round trip.
        if pad > 0:
            h = jnp.concatenate([jnp.zeros((n_ch, pad), h.dtype), h], axis=1)
        # im2col: K shifted views stacked along sublanes -> ONE MXU matmul
        # with contraction depth K*n_ch instead of K shallow ones.
        cols = jnp.concatenate(
            [h[:, j * dilation:j * dilation + L] for j in range(kernel_size)],
            axis=0)                                       # (K*n_ch, L)
        return jnp.dot(w_mat, cols, preferred_element_type=jnp.float32)

    # conv1 -> ReLU   (dropout1 = identity at inference)
    a1 = jnp.maximum(dilated_conv(xb, w1_ref[...], c_in) + b1_ref[...], 0.0)
    # conv2 -> ReLU   (dropout2 = identity at inference)
    a2 = jnp.maximum(dilated_conv(a1.astype(xb.dtype), w2_ref[...], c_out)
                     + b2_ref[...], 0.0)

    # Residual: 1x1 conv only when in_ch != out_ch, otherwise plain identity
    # (no eye() matmul, no zero-bias add).
    if has_res_conv:
        res = jnp.dot(wr_ref[...], xb,
                      preferred_element_type=jnp.float32) + br_ref[...]
    else:
        res = xb.astype(jnp.float32)

    o_ref[0] = (a2 + res).astype(o_ref.dtype)


# ---------------------------------------------------------------------------
# Wrapper: weight_norm fold + im2col weight layout (outside the hot kernel),
# grid over batch, everything else fused into the single pallas_call.
# ---------------------------------------------------------------------------
def tcn_block(params, x, *, kernel_size, dilation, compute_dtype=jnp.bfloat16):
    """x: (B, C_in, L) float32 (PyTorch Conv1d layout) -> (B, C_out, L) f32."""
    batch, c_in, seq_len = x.shape
    pad = (kernel_size - 1) * dilation

    # Effective conv weights, laid out for the im2col matmul:
    #   W_mat[o, j*C + c] = w[o, c, j]
    w1 = _weight_norm(params["conv1_v"], params["conv1_g"])   # (C_out, C_in, K)
    w2 = _weight_norm(params["conv2_v"], params["conv2_g"])   # (C_out, C_out, K)
    c_out = w1.shape[0]
    w1_mat = jnp.transpose(w1, (0, 2, 1)).reshape(c_out, kernel_size * c_in)
    w2_mat = jnp.transpose(w2, (0, 2, 1)).reshape(c_out, kernel_size * c_out)
    b1 = params["conv1_b"].reshape(c_out, 1).astype(jnp.float32)
    b2 = params["conv2_b"].reshape(c_out, 1).astype(jnp.float32)

    has_res_conv = "res_w" in params

    kernel = functools.partial(
        _tcn_block_kernel, kernel_size=kernel_size, dilation=dilation, pad=pad,
        c_in=c_in, c_out=c_out, seq_len=seq_len, has_res_conv=has_res_conv)

    def const_spec(shape):                     # grid-invariant (loaded once)
        return pl.BlockSpec(shape, lambda b: tuple(0 for _ in shape))

    in_specs = [pl.BlockSpec((1, c_in, seq_len), lambda b: (b, 0, 0)),
                const_spec(w1_mat.shape), const_spec(b1.shape),
                const_spec(w2_mat.shape), const_spec(b2.shape)]
    args = [x.astype(compute_dtype),
            w1_mat.astype(compute_dtype), b1,
            w2_mat.astype(compute_dtype), b2]

    if has_res_conv:
        w_res = params["res_w"][:, :, 0]                       # (C_out, C_in)
        b_res = params["res_b"].reshape(c_out, 1).astype(jnp.float32)
        in_specs += [const_spec(w_res.shape), const_spec(b_res.shape)]
        args += [w_res.astype(compute_dtype), b_res]

    # TODO(synk): for long sequences add a second (time) grid axis with a
    #             (kernel_size-1)*dilation halo per tile to bound VMEM on v7x.
    return pl.pallas_call(
        kernel,
        out_shape=jax.ShapeDtypeStruct((batch, c_out, seq_len), jnp.float32),
        grid=(batch,),
        in_specs=in_specs,
        out_specs=pl.BlockSpec((1, c_out, seq_len), lambda b: (b, 0, 0)),
        compiler_params=pltpu.CompilerParams(
            dimension_semantics=("parallel",),
            vmem_limit_bytes=32 * 1024 * 1024),
    )(*args)


# ---------------------------------------------------------------------------
# Pure-JAX reference (mirrors the PyTorch forward exactly: symmetric padding,
# final time-slice, weight_norm reparameterization, fp32).
# ---------------------------------------------------------------------------
def reference_tcn_block(params, x, *, kernel_size, dilation):
    pad = (kernel_size - 1) * dilation
    w1 = _weight_norm(params["conv1_v"], params["conv1_g"])
    w2 = _weight_norm(params["conv2_v"], params["conv2_g"])

    def conv1d(h, w, b, padding, dil):
        out = jax.lax.conv_general_dilated(
            h, w, window_strides=(1,), padding=[(padding, padding)],
            rhs_dilation=(dil,), dimension_numbers=("NCH", "OIH", "NCH"))
        return out + b[None, :, None]

    if "res_w" in params:
        residual = conv1d(x, params["res_w"], params["res_b"], 0, 1)
    else:
        residual = x
    h = jnp.maximum(conv1d(x, w1, params["conv1_b"], pad, dilation), 0.0)
    h = jnp.maximum(conv1d(h, w2, params["conv2_b"], pad, dilation), 0.0)
    h = h[:, :, :residual.shape[2]]
    return h + residual


def init_params(key, in_channels, out_channels, kernel_size):
    """PyTorch Conv1d default init + weight_norm init (g = ||v|| per out-ch)."""
    def conv_init(k, c_out, c_in, ksz):
        bound = 1.0 / math.sqrt(c_in * ksz)
        kw, kb = jax.random.split(k)
        w = jax.random.uniform(kw, (c_out, c_in, ksz), jnp.float32, -bound, bound)
        b = jax.random.uniform(kb, (c_out,), jnp.float32, -bound, bound)
        return w, b

    k1, k2, k3 = jax.random.split(key, 3)
    v1, b1 = conv_init(k1, out_channels, in_channels, kernel_size)
    v2, b2 = conv_init(k2, out_channels, out_channels, kernel_size)
    params = {
        "conv1_v": v1, "conv1_g": jnp.sqrt(jnp.sum(v1 * v1, axis=(1, 2))), "conv1_b": b1,
        "conv2_v": v2, "conv2_g": jnp.sqrt(jnp.sum(v2 * v2, axis=(1, 2))), "conv2_b": b2,
    }
    if in_channels != out_channels:
        wr, br = conv_init(k3, out_channels, in_channels, 1)
        params["res_w"] = wr
        params["res_b"] = br
    return params


if __name__ == "__main__":
    batch, in_channels, out_channels = 2, 16, 32
    seq_len, kernel_size, dilation = 32, 3, 2

    key = jax.random.PRNGKey(0)
    kp, kx = jax.random.split(key)
    params = init_params(kp, in_channels, out_channels, kernel_size)
    x = jax.random.normal(kx, (batch, in_channels, seq_len), jnp.float32)

    ref = reference_tcn_block(params, x, kernel_size=kernel_size,
                              dilation=dilation)

    # f32 compute path: tight check of conv / pad / residual semantics.
    fwd_f32 = jax.jit(functools.partial(tcn_block, kernel_size=kernel_size,
                                        dilation=dilation,
                                        compute_dtype=jnp.float32))
    out_f32 = jax.block_until_ready(fwd_f32(params, x))
    assert out_f32.shape == (batch, out_channels, seq_len)
    assert jnp.allclose(out_f32, ref, atol=1e-4, rtol=1e-4), "f32 mismatch"

    # bf16 compute path (MXU-native on v5e/v6e/v7x), f32 accumulation.
    fwd_bf16 = jax.jit(functools.partial(tcn_block, kernel_size=kernel_size,
                                         dilation=dilation,
                                         compute_dtype=jnp.bfloat16))
    out_bf16 = jax.block_until_ready(fwd_bf16(params, x))
    assert out_bf16.shape == (batch, out_channels, seq_len)
    assert jnp.allclose(out_bf16, ref, atol=5e-2, rtol=5e-2), "bf16 mismatch"

    print("KERNEL_OK")
</pallas_src>

<mosaic_0001>
module attributes {stable_mosaic.version = 11 : i64} {
  func.func @_tcn_block_kernel(%arg0: i32, %arg1: memref<1x16x32xf32, #tpu.memory_space<vmem>>, %arg2: memref<32x48xf32, #tpu.memory_space<vmem>>, %arg3: memref<32x1xf32, #tpu.memory_space<vmem>>, %arg4: memref<32x96xf32, #tpu.memory_space<vmem>>, %arg5: memref<32x1xf32, #tpu.memory_space<vmem>>, %arg6: memref<32x16xf32, #tpu.memory_space<vmem>>, %arg7: memref<32x1xf32, #tpu.memory_space<vmem>>, %arg8: memref<1x32x32xf32, #tpu.memory_space<vmem>>) attributes {dimension_semantics = [#tpu.dimension_semantics<parallel>], iteration_bounds = array<i64: 2>, scalar_prefetch = 0 : i64, scratch_operands = 0 : i64, tpu.core_type = #tpu.core_type<tc>, window_params = [{transform_indices = @transform_0, window_bounds = array<i64: 1, 16, 32>}, {pipeline_mode = #tpu.pipeline_mode<synchronous>, transform_indices = @transform_1, window_bounds = array<i64: 32, 48>}, {pipeline_mode = #tpu.pipeline_mode<synchronous>, transform_indices = @transform_2, window_bounds = array<i64: 32, 1>}, {pipeline_mode = #tpu.pipeline_mode<synchronous>, transform_indices = @transform_3, window_bounds = array<i64: 32, 96>}, {pipeline_mode = #tpu.pipeline_mode<synchronous>, transform_indices = @transform_4, window_bounds = array<i64: 32, 1>}, {pipeline_mode = #tpu.pipeline_mode<synchronous>, transform_indices = @transform_5, window_bounds = array<i64: 32, 16>}, {pipeline_mode = #tpu.pipeline_mode<synchronous>, transform_indices = @transform_6, window_bounds = array<i64: 32, 1>}, {transform_indices = @transform_7, window_bounds = array<i64: 1, 32, 32>}]} {
    %c0 = arith.constant 0 : index
    %c0_0 = arith.constant 0 : index
    %c0_1 = arith.constant 0 : index
    %0 = vector.load %arg1[%c0, %c0_0, %c0_1] : memref<1x16x32xf32, #tpu.memory_space<vmem>>, vector<1x16x32xf32>
    %1 = vector.shape_cast %0 : vector<1x16x32xf32> to vector<16x32xf32>
    %c0_2 = arith.constant 0 : index
    %c0_3 = arith.constant 0 : index
    %2 = vector.load %arg2[%c0_2, %c0_3] : memref<32x48xf32, #tpu.memory_space<vmem>>, vector<32x48xf32>
    %cst = arith.constant 0.000000e+00 : f32
    %3 = vector.broadcast %cst : f32 to vector<16x4xf32>
    %4 = tpu.concatenate %3, %1 in 1 : vector<16x4xf32>, vector<16x32xf32> -> vector<16x36xf32>
    %5 = vector.extract_strided_slice %4 {offsets = [0, 0], sizes = [16, 32], strides = [1, 1]} : vector<16x36xf32> to vector<16x32xf32>
    %6 = vector.extract_strided_slice %4 {offsets = [0, 2], sizes = [16, 32], strides = [1, 1]} : vector<16x36xf32> to vector<16x32xf32>
    %7 = vector.extract_strided_slice %4 {offsets = [0, 4], sizes = [16, 32], strides = [1, 1]} : vector<16x36xf32> to vector<16x32xf32>
    %8 = tpu.concatenate %5, %6, %7 in 0 : vector<16x32xf32>, vector<16x32xf32>, vector<16x32xf32> -> vector<48x32xf32>
    %cst_4 = arith.constant dense<0.000000e+00> : vector<32x32xf32>
    %9 = tpu.matmul %2, %8, %cst_4 {dimension_numbers = #tpu.dot_dimension_numbers<[1], [0], [0], [1], [0, 0, 1, 1], [], []>} : vector<32x48xf32>, vector<48x32xf32>, vector<32x32xf32> -> vector<32x32xf32>
    %c0_5 = arith.constant 0 : index
    %c0_6 = arith.constant 0 : index
    %10 = vector.load %arg3[%c0_5, %c0_6] : memref<32x1xf32, #tpu.memory_space<vmem>>, vector<32x1xf32>
    %11 = vector.broadcast %10 : vector<32x1xf32> to vector<32x32xf32>
    %12 = arith.addf %9, %11 : vector<32x32xf32>
    %cst_7 = arith.constant 0.000000e+00 : f32
    %13 = vector.broadcast %cst_7 : f32 to vector<32x32xf32>
    %14 = arith.maximumf %12, %13 : vector<32x32xf32>
    %c0_8 = arith.constant 0 : index
    %c0_9 = arith.constant 0 : index
    %15 = vector.load %arg4[%c0_8, %c0_9] : memref<32x96xf32, #tpu.memory_space<vmem>>, vector<32x96xf32>
    %cst_10 = arith.constant 0.000000e+00 : f32
    %16 = vector.broadcast %cst_10 : f32 to vector<32x4xf32>
    %17 = tpu.concatenate %16, %14 in 1 : vector<32x4xf32>, vector<32x32xf32> -> vector<32x36xf32>
    %18 = vector.extract_strided_slice %17 {offsets = [0, 0], sizes = [32, 32], strides = [1, 1]} : vector<32x36xf32> to vector<32x32xf32>
    %19 = vector.extract_strided_slice %17 {offsets = [0, 2], sizes = [32, 32], strides = [1, 1]} : vector<32x36xf32> to vector<32x32xf32>
    %20 = vector.extract_strided_slice %17 {offsets = [0, 4], sizes = [32, 32], strides = [1, 1]} : vector<32x36xf32> to vector<32x32xf32>
    %21 = tpu.concatenate %18, %19, %20 in 0 : vector<32x32xf32>, vector<32x32xf32>, vector<32x32xf32> -> vector<96x32xf32>
    %cst_11 = arith.constant dense<0.000000e+00> : vector<32x32xf32>
    %22 = tpu.matmul %15, %21, %cst_11 {dimension_numbers = #tpu.dot_dimension_numbers<[1], [0], [0], [1], [0, 0, 1, 1], [], []>} : vector<32x96xf32>, vector<96x32xf32>, vector<32x32xf32> -> vector<32x32xf32>
    %c0_12 = arith.constant 0 : index
    %c0_13 = arith.constant 0 : index
    %23 = vector.load %arg5[%c0_12, %c0_13] : memref<32x1xf32, #tpu.memory_space<vmem>>, vector<32x1xf32>
    %24 = vector.broadcast %23 : vector<32x1xf32> to vector<32x32xf32>
    %25 = arith.addf %22, %24 : vector<32x32xf32>
    %cst_14 = arith.constant 0.000000e+00 : f32
    %26 = vector.broadcast %cst_14 : f32 to vector<32x32xf32>
    %27 = arith.maximumf %25, %26 : vector<32x32xf32>
    %c0_15 = arith.constant 0 : index
    %c0_16 = arith.constant 0 : index
    %28 = vector.load %arg6[%c0_15, %c0_16] : memref<32x16xf32, #tpu.memory_space<vmem>>, vector<32x16xf32>
    %cst_17 = arith.constant dense<0.000000e+00> : vector<32x32xf32>
    %29 = tpu.matmul %28, %1, %cst_17 {dimension_numbers = #tpu.dot_dimension_numbers<[1], [0], [0], [1], [0, 0, 1, 1], [], []>} : vector<32x16xf32>, vector<16x32xf32>, vector<32x32xf32> -> vector<32x32xf32>
    %c0_18 = arith.constant 0 : index
    %c0_19 = arith.constant 0 : index
    %30 = vector.load %arg7[%c0_18, %c0_19] : memref<32x1xf32, #tpu.memory_space<vmem>>, vector<32x1xf32>
    %31 = vector.broadcast %30 : vector<32x1xf32> to vector<32x32xf32>
    %32 = arith.addf %29, %31 : vector<32x32xf32>
    %33 = arith.addf %27, %32 : vector<32x32xf32>
    %c0_20 = arith.constant 0 : index
    %c0_21 = arith.constant 0 : index
    %c0_22 = arith.constant 0 : index
    %34 = vector.load %arg8[%c0_20, %c0_21, %c0_22] : memref<1x32x32xf32, #tpu.memory_space<vmem>>, vector<1x32x32xf32>
    %35 = vector.shape_cast %34 : vector<1x32x32xf32> to vector<32x32xf32>
    %36 = vector.shape_cast %33 : vector<32x32xf32> to vector<1x32x32xf32>
    tpu.vector_store %arg8[%c0_20, %c0_21, %c0_22], %36 {strides = array<i32>} : memref<1x32x32xf32, #tpu.memory_space<vmem>>, vector<1x32x32xf32>,
    return
  }
  func.func @transform_0(%arg0: i32) -> (i32, i32, i32) {
    %c0_i32 = arith.constant 0 : i32
    %c0_i32_0 = arith.constant 0 : i32
    %c0_i32_1 = arith.constant 0 : i32
    return %arg0, %c0_i32, %c0_i32_0 : i32, i32, i32
  }
  func.func @transform_1(%arg0: i32) -> (i32, i32) {
    %c0_i32 = arith.constant 0 : i32
    %c0_i32_0 = arith.constant 0 : i32
    %c0_i32_1 = arith.constant 0 : i32
    return %c0_i32, %c0_i32_0 : i32, i32
  }
  func.func @transform_2(%arg0: i32) -> (i32, i32) {
    %c0_i32 = arith.constant 0 : i32
    %c0_i32_0 = arith.constant 0 : i32
    %c0_i32_1 = arith.constant 0 : i32
    return %c0_i32, %c0_i32_0 : i32, i32
  }
  func.func @transform_3(%arg0: i32) -> (i32, i32) {
    %c0_i32 = arith.constant 0 : i32
    %c0_i32_0 = arith.constant 0 : i32
    %c0_i32_1 = arith.constant 0 : i32
    return %c0_i32, %c0_i32_0 : i32, i32
  }
  func.func @transform_4(%arg0: i32) -> (i32, i32) {
    %c0_i32 = arith.constant 0 : i32
    %c0_i32_0 = arith.constant 0 : i32
    %c0_i32_1 = arith.constant 0 : i32
    return %c0_i32, %c0_i32_0 : i32, i32
  }
  func.func @transform_5(%arg0: i32) -> (i32, i32) {
    %c0_i32 = arith.constant 0 : i32
    %c0_i32_0 = arith.constant 0 : i32
    %c0_i32_1 = arith.constant 0 : i32
    return %c0_i32, %c0_i32_0 : i32, i32
  }
  func.func @transform_6(%arg0: i32) -> (i32, i32) {
    %c0_i32 = arith.constant 0 : i32
    %c0_i32_0 = arith.constant 0 : i32
    %c0_i32_1 = arith.constant 0 : i32
    return %c0_i32, %c0_i32_0 : i32, i32
  }
  func.func @transform_7(%arg0: i32) -> (i32, i32, i32) {
    %c0_i32 = arith.constant 0 : i32
    %c0_i32_0 = arith.constant 0 : i32
    %c0_i32_1 = arith.constant 0 : i32
    return %arg0, %c0_i32, %c0_i32_0 : i32, i32, i32
  }
}

</mosaic_0001>

<llo_original>
// kernel: tcn_block.1
$region0: #{tcn_block.1}
  #allocation0 [shape = 'u32[]', space=smem, size = 0x4, offset = 0x4, fixed_abs, tag = 'smem constant byte address 0x4 - core index']
  #allocation1 [shape = 'u32[144,128]{1,0:T(1,128)}', space=vmem, size = 0x12000, scoped, tag = 'internal scratch']
  %s0 = inlined_call_operand.vmem [shape: f32[2,16,32], index: 0, kind: input, shape index: {}]
  %s1 = inlined_call_operand.vmem [shape: f32[32,48], index: 1, kind: input, shape index: {}]
  %s2 = inlined_call_operand.vmem [shape: f32[32,1], index: 2, kind: input, shape index: {}]
  %s3 = inlined_call_operand.vmem [shape: f32[32,96], index: 3, kind: input, shape index: {}]
  %s4 = inlined_call_operand.vmem [shape: f32[32,1], index: 4, kind: input, shape index: {}]
  %s5 = inlined_call_operand.vmem [shape: f32[32,16], index: 5, kind: input, shape index: {}]
  %s6 = inlined_call_operand.vmem [shape: f32[32,1], index: 6, kind: input, shape index: {}]
  %s7 = inlined_call_operand.hbm [shape: f32[2,32,32], index: 7, kind: output, shape index: {}]
  %s8 = sld [smem:[#allocation0]]
  $region61: #{tcn_block.1} parent=0
    _
  %s10 = ssub.s32 1, %s8
  %s11 = scalar_select 0, %s10, %s8
  $region1: #{tcn_block.1} parent=0
    #allocation2 [shape = 'u8[32768]{0}', space=vmem, size = 0x8000, scoped, tag = 'output window, operand 0']
    #allocation3 [shape = 's32[2]{0}', space=sflag, size = 0x8, scoped, tag = 'scoped memory for tcn_block.1']
    %12 = vsyncpa [#allocation3], 0
    %s13 = scalar_lea.sflag [#allocation3], 1
    %14 = vsyncpa %s13, 0
    loop: start=0, step=1, limit=4
    $region2: #{tcn_block.1} parent=1 // loop_pre_header
      _
    $region3: #{tcn_block.1} parent=1 // loop_header
      %s16 = sphi 0, %s20
      %p17 = scmp.ge.s32.totalorder %s16, 4
      %s26 = sphi 0, %s28
      %s29 = sphi 0, %s26
      %s30 = sphi 0, %s29
      %s46 = sphi 0, %s30
      %s50 = sphi 0, %s50
      %s52 = sphi 0, %s50
      %s53 = sphi 0, %s52
      %s67 = sphi 0, %s53
      %s71 = sphi 0, %s71
      %s73 = sphi 0, %s71
      %s74 = sphi 0, %s73
      %s88 = sphi 0, %s74
      %s92 = sphi 0, %s92
      %s94 = sphi 0, %s92
      %s95 = sphi 0, %s94
      %s109 = sphi 0, %s95
      %s113 = sphi 0, %s113
      %s115 = sphi 0, %s113
      %s116 = sphi 0, %s115
      %s130 = sphi 0, %s116
      %s134 = sphi 0, %s134
      %s136 = sphi 0, %s134
      %s137 = sphi 0, %s136
      %s151 = sphi 0, %s137
      %s155 = sphi 0, %s155
      %s157 = sphi 0, %s155
      %s158 = sphi 0, %s157
      %s172 = sphi 0, %s158
      %s178 = sphi 0, %s180
      %s181 = sphi 0, %s178
      %s182 = sphi 0, %s181
      %s198 = sphi 0, %s182
    $region4: #{tcn_block.1} parent=1 // loop_header_branch
      %19 = sbr.rel (%p17) target = $region8
    $region5: #{tcn_block.1} parent=1 // loop_body
      %s21 = ssub.s32 %s16, 1
      %s22 = ssub.s32 %s16, 2
      %s23 = sadd.s32 %s16, 1
      %s24 = ssub.s32 %s16, %s23
      %p25 = scmp.eq.s32.totalorder %s24, 0
      %s27 = sadd.s32 %s26, 1
      %s28 = scalar_select %p25, %s26, %s27
      %p31 = pneg %p25
      %p32 = scmp.eq.s32.totalorder %s16, 1
      %p33 = por %p31, %p32
      %p34 = scmp.ne.s32.totalorder %s26, %s29
      %p35 = scmp.eq.s32.totalorder %s16, 0
      %p36 = por %p34, %p35
      %p37 = scmp.ne.s32.totalorder %s26, %s29
      %p38 = scmp.eq.s32.totalorder %s21, 1
      %p39 = por %p37, %p38
      %p40 = scmp.ne.s32.totalorder %s29, %s30
      %p41 = scmp.eq.s32.totalorder %s21, 0
      %p42 = por %p40, %p41
      %p43 = scmp.ne.s32.totalorder %s29, %s30
      %p44 = scmp.eq.s32.totalorder %s22, 1
      %p45 = por %p43, %p44
      %p47 = scmp.ne.s32.totalorder %s30, %s46
      %p48 = scmp.eq.s32.totalorder %s22, 0
      %p49 = por %p47, %p48
      %s51 = sadd.s32 %s50, 1
      %p54 = scmp.eq.s32.totalorder %s16, 1
      %p55 = scmp.ne.s32.totalorder %s50, %s52
      %p56 = scmp.eq.s32.totalorder %s16, 0
      %p57 = por %p55, %p56
      %p58 = scmp.ne.s32.totalorder %s50, %s52
      %p59 = scmp.eq.s32.totalorder %s21, 1
      %p60 = por %p58, %p59
      %p61 = scmp.ne.s32.totalorder %s52, %s53
      %p62 = scmp.eq.s32.totalorder %s21, 0
      %p63 = por %p61, %p62
      %p64 = scmp.ne.s32.totalorder %s52, %s53
      %p65 = scmp.eq.s32.totalorder %s22, 1
      %p66 = por %p64, %p65
      %p68 = scmp.ne.s32.totalorder %s53, %s67
      %p69 = scmp.eq.s32.totalorder %s22, 0
      %p70 = por %p68, %p69
      %s72 = sadd.s32 %s71, 1
      %p75 = scmp.eq.s32.totalorder %s16, 1
      %p76 = scmp.ne.s32.totalorder %s71, %s73
      %p77 = scmp.eq.s32.totalorder %s16, 0
      %p78 = por %p76, %p77
      %p79 = scmp.ne.s32.totalorder %s71, %s73
      %p80 = scmp.eq.s32.totalorder %s21, 1
      %p81 = por %p79, %p80
      %p82 = scmp.ne.s32.totalorder %s73, %s74
      %p83 = scmp.eq.s32.totalorder %s21, 0
      %p84 = por %p82, %p83
      %p85 = scmp.ne.s32.totalorder %s73, %s74
      %p86 = scmp.eq.s32.totalorder %s22, 1
      %p87 = por %p85, %p86
      %p89 = scmp.ne.s32.totalorder %s74, %s88
      %p90 = scmp.eq.s32.totalorder %s22, 0
      %p91 = por %p89, %p90
      %s93 = sadd.s32 %s92, 1
      %p96 = scmp.eq.s32.totalorder %s16, 1
      %p97 = scmp.ne.s32.totalorder %s92, %s94
      %p98 = scmp.eq.s32.totalorder %s16, 0
      %p99 = por %p97, %p98
      %p100 = scmp.ne.s32.totalorder %s92, %s94
      %p101 = scmp.eq.s32.totalorder %s21, 1
      %p102 = por %p100, %p101
      %p103 = scmp.ne.s32.totalorder %s94, %s95
      %p104 = scmp.eq.s32.totalorder %s21, 0
      %p105 = por %p103, %p104
      %p106 = scmp.ne.s32.totalorder %s94, %s95
      %p107 = scmp.eq.s32.totalorder %s22, 1
      %p108 = por %p106, %p107
      %p110 = scmp.ne.s32.totalorder %s95, %s109
      %p111 = scmp.eq.s32.totalorder %s22, 0
      %p112 = por %p110, %p111
      %s114 = sadd.s32 %s113, 1
      %p117 = scmp.eq.s32.totalorder %s16, 1
      %p118 = scmp.ne.s32.totalorder %s113, %s115
      %p119 = scmp.eq.s32.totalorder %s16, 0
      %p120 = por %p118, %p119
      %p121 = scmp.ne.s32.totalorder %s113, %s115
      %p122 = scmp.eq.s32.totalorder %s21, 1
      %p123 = por %p121, %p122
      %p124 = scmp.ne.s32.totalorder %s115, %s116
      %p125 = scmp.eq.s32.totalorder %s21, 0
      %p126 = por %p124, %p125
      %p127 = scmp.ne.s32.totalorder %s115, %s116
      %p128 = scmp.eq.s32.totalorder %s22, 1
      %p129 = por %p127, %p128
      %p131 = scmp.ne.s32.totalorder %s116, %s130
      %p132 = scmp.eq.s32.totalorder %s22, 0
      %p133 = por %p131, %p132
      %s135 = sadd.s32 %s134, 1
      %p138 = scmp.eq.s32.totalorder %s16, 1
      %p139 = scmp.ne.s32.totalorder %s134, %s136
      %p140 = scmp.eq.s32.totalorder %s16, 0
      %p141 = por %p139, %p140
      %p142 = scmp.ne.s32.totalorder %s134, %s136
      %p143 = scmp.eq.s32.totalorder %s21, 1
      %p144 = por %p142, %p143
      %p145 = scmp.ne.s32.totalorder %s136, %s137
      %p146 = scmp.eq.s32.totalorder %s21, 0
      %p147 = por %p145, %p146
      %p148 = scmp.ne.s32.totalorder %s136, %s137
      %p149 = scmp.eq.s32.totalorder %s22, 1
      %p150 = por %p148, %p149
      %p152 = scmp.ne.s32.totalorder %s137, %s151
      %p153 = scmp.eq.s32.totalorder %s22, 0
      %p154 = por %p152, %p153
      %s156 = sadd.s32 %s155, 1
      %p159 = scmp.eq.s32.totalorder %s16, 1
      %p160 = scmp.ne.s32.totalorder %s155, %s157
      %p161 = scmp.eq.s32.totalorder %s16, 0
      %p162 = por %p160, %p161
      %p163 = scmp.ne.s32.totalorder %s155, %s157
      %p164 = scmp.eq.s32.totalorder %s21, 1
      %p165 = por %p163, %p164
      %p166 = scmp.ne.s32.totalorder %s157, %s158
      %p167 = scmp.eq.s32.totalorder %s21, 0
      %p168 = por %p166, %p167
      %p169 = scmp.ne.s32.totalorder %s157, %s158
      %p170 = scmp.eq.s32.totalorder %s22, 1
      %p171 = por %p169, %p170
      %p173 = scmp.ne.s32.totalorder %s158, %s172
      %p174 = scmp.eq.s32.totalorder %s22, 0
      %p175 = por %p173, %p174
      %s176 = ssub.s32 %s16, %s23
      %p177 = scmp.eq.s32.totalorder %s176, 0
      %s179 = sadd.s32 %s178, 1
      %s180 = scalar_select %p177, %s178, %s179
      %p183 = pneg %p177
      %p184 = scmp.eq.s32.totalorder %s16, 1
      %p185 = por %p183, %p184
      %p186 = scmp.ne.s32.totalorder %s178, %s181
      %p187 = scmp.eq.s32.totalorder %s16, 0
      %p188 = por %p186, %p187
      %p189 = scmp.ne.s32.totalorder %s178, %s181
      %p190 = scmp.eq.s32.totalorder %s21, 1
      %p191 = por %p189, %p190
      %p192 = scmp.ne.s32.totalorder %s181, %s182
      %p193 = scmp.eq.s32.totalorder %s21, 0
      %p194 = por %p192, %p193
      %p195 = scmp.ne.s32.totalorder %s181, %s182
      %p196 = scmp.eq.s32.totalorder %s22, 1
      %p197 = por %p195, %p196
      %p199 = scmp.ne.s32.totalorder %s182, %s198
      %p200 = scmp.eq.s32.totalorder %s22, 0
      %p201 = por %p199, %p200
      %p202 = scmp.le.s32.totalorder 1, %s16
      %p203 = scmp.lt.s32.totalorder %s16, 3
      %p204 = pnand %p202, %p203
      %p205 = pneg %p204
      // Predicated region
      $region9: #{tcn_block.1} parent=5 // pred_check
        _
      $region10: #{tcn_block.1} parent=5 // pred_check_branch
        %207 = sbr.rel (%p204) target = $region12
      $region11: #{tcn_block.1} parent=5 // pred_region
        %s208 = ssub.s32 %s16, 1
        // Predicated region
        $region13: #{tcn_block.1} parent=11 // pred_check
          %p209 = pneg %p63
        $region14: #{tcn_block.1} parent=11 // pred_check_branch
          %211 = sbr.rel (%p209) target = $region16
        $region15: #{tcn_block.1} parent=11 // pred_region
          _
        $region16: #{tcn_block.1} parent=11 // pred_fallthru
          _
        // Predicated region
        $region17: #{tcn_block.1} parent=11 // pred_check
          %p212 = pneg %p84
        $region18: #{tcn_block.1} parent=11 // pred_check_branch
          %214 = sbr.rel (%p212) target = $region20
        $region19: #{tcn_block.1} parent=11 // pred_region
          _
        $region20: #{tcn_block.1} parent=11 // pred_fallthru
          _
        // Predicated region
        $region21: #{tcn_block.1} parent=11 // pred_check
          %p215 = pneg %p105
        $region22: #{tcn_block.1} parent=11 // pred_check_branch
          %217 = sbr.rel (%p215) target = $region24
        $region23: #{tcn_block.1} parent=11 // pred_region
          _
        $region24: #{tcn_block.1} parent=11 // pred_fallthru
          _
        // Predicated region
        $region25: #{tcn_block.1} parent=11 // pred_check
          %p218 = pneg %p126
        $region26: #{tcn_block.1} parent=11 // pred_check_branch
          %220 = sbr.rel (%p218) target = $region28
        $region27: #{tcn_block.1} parent=11 // pred_region
          _
        $region28: #{tcn_block.1} parent=11 // pred_fallthru
          _
        // Predicated region
        $region29: #{tcn_block.1} parent=11 // pred_check
          %p221 = pneg %p147
        $region30: #{tcn_block.1} parent=11 // pred_check_branch
          %223 = sbr.rel (%p221) target = $region32
        $region31: #{tcn_block.1} parent=11 // pred_region
          _
        $region32: #{tcn_block.1} parent=11 // pred_fallthru
          _
        // Predicated region
        $region33: #{tcn_block.1} parent=11 // pred_check
          %p224 = pneg %p168
        $region34: #{tcn_block.1} parent=11 // pred_check_branch
          %226 = sbr.rel (%p224) target = $region36
        $region35: #{tcn_block.1} parent=11 // pred_region
          _
        $region36: #{tcn_block.1} parent=11 // pred_fallthru
          _
      $region12: #{tcn_block.1} parent=5 // pred_fallthru
        _
      %p227 = scmp.lt.s32.totalorder %s16, 2
      // Predicated region
      $region37: #{tcn_block.1} parent=5 // pred_check
        %p228 = pneg %p227
      $region38: #{tcn_block.1} parent=5 // pred_check_branch
        %230 = sbr.rel (%p228) target = $region40
      $region39: #{tcn_block.1} parent=5 // pred_region
        // Predicated region
        $region41: #{tcn_block.1} parent=39 // pred_check
          %p231 = pneg %p36
        $region42: #{tcn_block.1} parent=39 // pred_check_branch
          %233 = sbr.rel (%p231) target = $region44
        $region43: #{tcn_block.1} parent=39 // pred_region
          %p234 = scmp.lt.s32.totalorder %s16, 1
          %s235 = scalar_select %p234, %s16, 1
          %s236 = smul.addr %s235, 2
          %s237 = smul.addr %s236, 8
          %s238 = scalar_lea.vmem %s0, %s237
        $region44: #{tcn_block.1} parent=39 // pred_fallthru
          _
      $region40: #{tcn_block.1} parent=5 // pred_fallthru
        _
      %p239 = scmp.le.s32.totalorder 1, %s16
      %p240 = scmp.lt.s32.totalorder %s16, 3
      %p241 = pnand %p239, %p240
      %p242 = pneg %p241
      // Predicated region
      $region45: #{tcn_block.1} parent=5 // pred_check
        _
      $region46: #{tcn_block.1} parent=5 // pred_check_branch
        %244 = sbr.rel (%p241) target = $region48
      $region47: #{tcn_block.1} parent=5 // pred_region
        %s245 = ssub.s32 %s16, 1
        %p246 = scmp.lt.s32.totalorder %s21, 1
        %s247 = scalar_select %p246, %s21, 1
        %s248 = smul.addr %s247, 2
        %s249 = smul.addr %s248, 8
        %s250 = scalar_lea.vmem %s0, %s249
        %p251 = pneg %p42
        %p252 = pneg %p39
        %p253 = pneg %p63
        %p254 = pneg %p60
        %p255 = pneg %p84
        %p256 = pneg %p81
        %p257 = pneg %p105
        %p258 = pneg %p102
        %p259 = pneg %p126
        %p260 = pneg %p123
        %p261 = pneg %p147
        %p262 = pneg %p144
        %p263 = pneg %p168
        %p264 = pneg %p165
        %p265 = pneg %p194
        %p266 = pneg %p191
        %s267 = sand.u32 %s181, 1
        %s268 = scalar_lea.sflag [#allocation3], %s267
        %s269 = sand.u32 %s181, 1
        %s270 = smul.addr %s269, 32
        %s271 = scalar_lea.vmem [#allocation2], %s270
        %p272 = scmp.lt.s32.totalorder %s21, 1
        %s273 = scalar_select %p272, %s21, 1
        %s274 = smul.addr %s273, 2
        %s275 = smul.addr %s274, 8
        %s276 = scalar_lea.vmem %s0, %s275
        %v277 = vld [vmem:[%s276] sm:$0xff]
        %v278 = vld [vmem:[%s276 + $0x8] sm:$0xff]
        %v279 = vld [vmem:[%s1] sm:$0xff]
        %v280 = vld [vmem:[%s1 + $0x8] sm:$0xff]
        %v281 = vld [vmem:[%s1 + $0x10] sm:$0xff]
        %v282 = vld [vmem:[%s1 + $0x18] sm:$0xff]
        %285 = vrot.lane.b32.xlu0 %v277, 4
        %v286 = vpop.permute.xlu0 %285
        %287 = vrot.lane.b32.xlu0 %v278, 4
        %v288 = vpop.permute.xlu0 %287
        %vm291 = vcmask 31744
        %v292 = vsel %vm291, 0.0, %v286
        %v293 = vsel %vm291, 0.0, %v288
        %296 = vrot.lane.b32.xlu0 %v292, 126
        %v297 = vpop.permute.xlu0 %296
        %298 = vrot.lane.b32.xlu0 %v293, 126
        %v299 = vpop.permute.xlu0 %298
        %302 = vrot.lane.b32.xlu0 %v292, 124
        %v303 = vpop.permute.xlu0 %302
        %304 = vrot.lane.b32.xlu0 %v293, 124
        %v305 = vpop.permute.xlu0 %304
        %v308 = vld [vmem:[%s2] sm:$0xff]
        %v309 = vld [vmem:[%s2 + $0x8] sm:$0xff]
        %v310 = vld [vmem:[%s2 + $0x10] sm:$0xff]
        %v311 = vld [vmem:[%s2 + $0x18] sm:$0xff]
        %313 = vset.pattern.permute.xlu0 0
        %314 = vperm.xlu0 %313, %v308
        %v315 = vpop.permute.xlu0 %314
        %318 = vset.pattern.permute.xlu0 0
        %319 = vperm.xlu0 %318, %v309
        %v320 = vpop.permute.xlu0 %319
        %323 = vset.pattern.permute.xlu0 0
        %324 = vperm.xlu0 %323, %v310
        %v325 = vpop.permute.xlu0 %324
        %328 = vset.pattern.permute.xlu0 0
        %329 = vperm.xlu0 %328, %v311
        %v330 = vpop.permute.xlu0 %329
        %vm332 = vcmask 392192
        %v334 = vsel %vm332, %v279, 0
        %v337 = vsel %vm332, %v280, 0
        %v340 = vsel %vm332, %v281, 0
        %v343 = vsel %vm332, %v282, 0
        %345 = vmatprep.subr.mxu0 0.0
        %346 = vmatpush1.msra.mxu0 0.0
        %347 = vmatprep.subr.mxu0 0.0
        %348 = vmatpush1.msra.mxu0 0.0
        %349 = vmatprep.subr.mxu0 0.0
        %350 = vmatpush1.msra.mxu0 0.0
        %351 = vmatprep.subr.mxu0 0.0
        %352 = vmatpush1.msra.mxu0 0.0
        %353 = vmatprep.subr.mxu0 0.0
        %354 = vmatpush1.msra.mxu0 0.0
        %355 = vmatprep.subr.mxu0 0.0
        %356 = vmatpush1.msra.mxu0 0.0
        %357 = vmatprep.subr.mxu0 0.0
        %358 = vmatpush1.msra.mxu0 0.0
        %359 = vmatprep.subr.mxu0 0.0
        %360 = vmatpush1.msra.mxu0 0.0
        %361 = vmatprep.subr.mxu0 0.0
        %362 = vmatpush1.msra.mxu0 0.0
        %363 = vmatprep.subr.mxu0 0.0
        %364 = vmatpush1.msra.mxu0 0.0
        %365 = vmatprep.subr.mxu0 0.0
        %366 = vmatpush1.msra.mxu0 %v305
        %367 = vmatprep.subr.mxu0 0.0
        %368 = vmatpush1.msra.mxu0 %v303
        %369 = vmatprep.subr.mxu0 0.0
        %370 = vmatpush1.msra.mxu0 %v299
        %371 = vmatprep.subr.mxu0 0.0
        %372 = vmatpush1.msra.mxu0 %v297
        %373 = vmatprep.subr.mxu0 0.0
        %374 = vmatpush1.msra.mxu0 %v293
        %375 = vmatprep.subr.mxu0 0.0
        %376 = vmatpush1.msra.mxu0 %v292
        %377 = vmatprep.subr.mxu0 0.0
        %378 = vmatpush2.msra.mxu0 0.0
        %379 = vmatprep.subr.mxu0 0.0
        %380 = vmatpush2.msra.mxu0 0.0
        %381 = vmatprep.subr.mxu0 0.0
        %382 = vmatpush2.msra.mxu0 0.0
        %383 = vmatprep.subr.mxu0 0.0
        %384 = vmatpush2.msra.mxu0 0.0
        %385 = vmatprep.subr.mxu0 0.0
        %386 = vmatpush2.msra.mxu0 0.0
        %387 = vmatprep.subr.mxu0 0.0
        %388 = vmatpush2.msra.mxu0 0.0
        %389 = vmatprep.subr.mxu0 0.0
        %390 = vmatpush2.msra.mxu0 0.0
        %391 = vmatprep.subr.mxu0 0.0
        %392 = vmatpush2.msra.mxu0 0.0
        %393 = vmatprep.subr.mxu0 0.0
        %394 = vmatpush2.msra.mxu0 0.0
        %395 = vmatprep.subr.mxu0 0.0
        %396 = vmatpush2.msra.mxu0 0.0
        %397 = vmatprep.subr.mxu0 0.0
        %398 = vmatpush2.msra.mxu0 0.0
        %399 = vmatprep.subr.mxu0 0.0
        %400 = vmatpush2.msra.mxu0 0.0
        %401 = vmatprep.subr.mxu0 0.0
        %402 = vmatpush2.msra.mxu0 0.0
        %403 = vmatprep.subr.mxu0 0.0
        %404 = vmatpush2.msra.mxu0 0.0
        %405 = vmatprep.subr.mxu0 0.0
        %406 = vmatpush2.msra.mxu0 0.0
        %407 = vmatprep.subr.mxu0 0.0
        %408 = vmatpush2.msra.mxu0 0.0
        %409 = vmatprep.mubr.f32.mxu0 0.0
        %410 = vmatmul.mubr.f32.gmra.mxu0 %v334
        %v411 = vpop.f32.mrf.mxu0
        %v412 = vadd.f32 %v315, %v411
        %v413 = vpop.f32.mrf.mxu0
        %414 = vmatprep.mubr.f32.mxu0 0.0
        %415 = vmatmul.mubr.f32.gmra.mxu0 %v337
        %v416 = vpop.f32.mrf.mxu0
        %v417 = vadd.f32 %v320, %v416
        %v418 = vpop.f32.mrf.mxu0
        %419 = vmatprep.mubr.f32.mxu0 0.0
        %420 = vmatmul.mubr.f32.gmra.mxu0 %v340
        %v421 = vpop.f32.mrf.mxu0
        %v422 = vadd.f32 %v325, %v421
        %v423 = vpop.f32.mrf.mxu0
        %424 = vmatprep.mubr.f32.mxu0 0.0
        %425 = vmatmul.mubr.f32.gmra.mxu0 %v343
        %v426 = vpop.f32.mrf.mxu0
        %v427 = vadd.f32 %v330, %v426
        %v428 = vpop.f32.mrf.mxu0
        %429 = vdwg.mxu0
        %v430 = vmax.f32 %v412, 0.0
        %v431 = vmax.f32 %v417, 0.0
        %v432 = vmax.f32 %v422, 0.0
        %v433 = vmax.f32 %v427, 0.0
        %v434 = vld [vmem:[%s3] sm:$0xff]
        %v435 = vld [vmem:[%s3 + $0x8] sm:$0xff]
        %v436 = vld [vmem:[%s3 + $0x10] sm:$0xff]
        %v437 = vld [vmem:[%s3 + $0x18] sm:$0xff]
        %442 = vrot.lane.b32.xlu0 %v430, 4
        %v443 = vpop.permute.xlu0 %442
        %444 = vrot.lane.b32.xlu0 %v431, 4
        %v445 = vpop.permute.xlu0 %444
        %446 = vrot.lane.b32.xlu0 %v432, 4
        %v447 = vpop.permute.xlu0 %446
        %448 = vrot.lane.b32.xlu0 %v433, 4
        %v449 = vpop.permute.xlu0 %448
        %v454 = vsel %vm291, 0.0, %v443
        %v455 = vsel %vm291, 0.0, %v445
        %v456 = vsel %vm291, 0.0, %v447
        %v457 = vsel %vm291, 0.0, %v449
        %462 = vrot.lane.b32.xlu0 %v454, 126
        %v463 = vpop.permute.xlu0 %462
        %464 = vrot.lane.b32.xlu0 %v455, 126
        %v465 = vpop.permute.xlu0 %464
        %466 = vrot.lane.b32.xlu0 %v456, 126
        %v467 = vpop.permute.xlu0 %466
        %468 = vrot.lane.b32.xlu0 %v457, 126
        %v469 = vpop.permute.xlu0 %468
        %474 = vrot.lane.b32.xlu0 %v454, 124
        %v475 = vpop.permute.xlu0 %474
        %476 = vrot.lane.b32.xlu0 %v455, 124
        %v477 = vpop.permute.xlu0 %476
        %478 = vrot.lane.b32.xlu0 %v456, 124
        %v479 = vpop.permute.xlu0 %478
        %480 = vrot.lane.b32.xlu0 %v457, 124
        %v481 = vpop.permute.xlu0 %480
        %v486 = vld [vmem:[%s4] sm:$0xff]
        %v487 = vld [vmem:[%s4 + $0x8] sm:$0xff]
        %v488 = vld [vmem:[%s4 + $0x10] sm:$0xff]
        %v489 = vld [vmem:[%s4 + $0x18] sm:$0xff]
        %491 = vset.pattern.permute.xlu0 0
        %492 = vperm.xlu0 %491, %v486
        %v493 = vpop.permute.xlu0 %492
        %496 = vset.pattern.permute.xlu0 0
        %497 = vperm.xlu0 %496, %v487
        %v498 = vpop.permute.xlu0 %497
        %501 = vset.pattern.permute.xlu0 0
        %502 = vperm.xlu0 %501, %v488
        %v503 = vpop.permute.xlu0 %502
        %506 = vset.pattern.permute.xlu0 0
        %507 = vperm.xlu0 %506, %v489
        %v508 = vpop.permute.xlu0 %507
        %vm510 = vcmask 785408
        %v512 = vsel %vm510, %v434, 0
        %v515 = vsel %vm510, %v435, 0
        %v518 = vsel %vm510, %v436, 0
        %v521 = vsel %vm510, %v437, 0
        %523 = vmatprep.subr.mxu0 0.0
        %524 = vmatpush1.msra.mxu0 0.0
        %525 = vmatprep.subr.mxu0 0.0
        %526 = vmatpush1.msra.mxu0 0.0
        %527 = vmatprep.subr.mxu0 0.0
        %528 = vmatpush1.msra.mxu0 0.0
        %529 = vmatprep.subr.mxu0 0.0
        %530 = vmatpush1.msra.mxu0 0.0
        %531 = vmatprep.subr.mxu0 0.0
        %532 = vmatpush1.msra.mxu0 %v481
        %533 = vmatprep.subr.mxu0 0.0
        %534 = vmatpush1.msra.mxu0 %v479
        %535 = vmatprep.subr.mxu0 0.0
        %536 = vmatpush1.msra.mxu0 %v477
        %537 = vmatprep.subr.mxu0 0.0
        %538 = vmatpush1.msra.mxu0 %v475
        %539 = vmatprep.subr.mxu0 0.0
        %540 = vmatpush1.msra.mxu0 %v469
        %541 = vmatprep.subr.mxu0 0.0
        %542 = vmatpush1.msra.mxu0 %v467
        %543 = vmatprep.subr.mxu0 0.0
        %544 = vmatpush1.msra.mxu0 %v465
        %545 = vmatprep.subr.mxu0 0.0
        %546 = vmatpush1.msra.mxu0 %v463
        %547 = vmatprep.subr.mxu0 0.0
        %548 = vmatpush1.msra.mxu0 %v457
        %549 = vmatprep.subr.mxu0 0.0
        %550 = vmatpush1.msra.mxu0 %v456
        %551 = vmatprep.subr.mxu0 0.0
        %552 = vmatpush1.msra.mxu0 %v455
        %553 = vmatprep.subr.mxu0 0.0
        %554 = vmatpush1.msra.mxu0 %v454
        %555 = vmatprep.subr.mxu0 0.0
        %556 = vmatpush2.msra.mxu0 0.0
        %557 = vmatprep.subr.mxu0 0.0
        %558 = vmatpush2.msra.mxu0 0.0
        %559 = vmatprep.subr.mxu0 0.0
        %560 = vmatpush2.msra.mxu0 0.0
        %561 = vmatprep.subr.mxu0 0.0
        %562 = vmatpush2.msra.mxu0 0.0
        %563 = vmatprep.subr.mxu0 0.0
        %564 = vmatpush2.msra.mxu0 0.0
        %565 = vmatprep.subr.mxu0 0.0
        %566 = vmatpush2.msra.mxu0 0.0
        %567 = vmatprep.subr.mxu0 0.0
        %568 = vmatpush2.msra.mxu0 0.0
        %569 = vmatprep.subr.mxu0 0.0
        %570 = vmatpush2.msra.mxu0 0.0
        %571 = vmatprep.subr.mxu0 0.0
        %572 = vmatpush2.msra.mxu0 0.0
        %573 = vmatprep.subr.mxu0 0.0
        %574 = vmatpush2.msra.mxu0 0.0
        %575 = vmatprep.subr.mxu0 0.0
        %576 = vmatpush2.msra.mxu0 0.0
        %577 = vmatprep.subr.mxu0 0.0
        %578 = vmatpush2.msra.mxu0 0.0
        %579 = vmatprep.subr.mxu0 0.0
        %580 = vmatpush2.msra.mxu0 0.0
        %581 = vmatprep.subr.mxu0 0.0
        %582 = vmatpush2.msra.mxu0 0.0
        %583 = vmatprep.subr.mxu0 0.0
        %584 = vmatpush2.msra.mxu0 0.0
        %585 = vmatprep.subr.mxu0 0.0
        %586 = vmatpush2.msra.mxu0 0.0
        %587 = vmatprep.mubr.f32.mxu0 0.0
        %588 = vmatmul.mubr.f32.gmra.mxu0 %v512
        %v589 = vpop.f32.mrf.mxu0
        %v590 = vadd.f32 %v493, %v589
        %v591 = vpop.f32.mrf.mxu0
        %592 = vmatprep.mubr.f32.mxu0 0.0
        %593 = vmatmul.mubr.f32.gmra.mxu0 %v515
        %v594 = vpop.f32.mrf.mxu0
        %v595 = vadd.f32 %v498, %v594
        %v596 = vpop.f32.mrf.mxu0
        %597 = vmatprep.mubr.f32.mxu0 0.0
        %598 = vmatmul.mubr.f32.gmra.mxu0 %v518
        %v599 = vpop.f32.mrf.mxu0
        %v600 = vadd.f32 %v503, %v599
        %v601 = vpop.f32.mrf.mxu0
        %602 = vmatprep.mubr.f32.mxu0 0.0
        %603 = vmatmul.mubr.f32.gmra.mxu0 %v521
        %v604 = vpop.f32.mrf.mxu0
        %v605 = vadd.f32 %v508, %v604
        %v606 = vpop.f32.mrf.mxu0
        %607 = vdwg.mxu0
        %v608 = vmax.f32 %v590, 0.0
        %v609 = vmax.f32 %v595, 0.0
        %v610 = vmax.f32 %v600, 0.0
        %v611 = vmax.f32 %v605, 0.0
        %v612 = vld [vmem:[%s5] sm:$0xff]
        %v613 = vld [vmem:[%s5 + $0x8] sm:$0xff]
        %v614 = vld [vmem:[%s5 + $0x10] sm:$0xff]
        %v615 = vld [vmem:[%s5 + $0x18] sm:$0xff]
        %v616 = vld [vmem:[%s6] sm:$0xff]
        %v617 = vld [vmem:[%s6 + $0x8] sm:$0xff]
        %v618 = vld [vmem:[%s6 + $0x10] sm:$0xff]
        %v619 = vld [vmem:[%s6 + $0x18] sm:$0xff]
        %621 = vset.pattern.permute.xlu0 0
        %622 = vperm.xlu0 %621, %v616
        %v623 = vpop.permute.xlu0 %622
        %626 = vset.pattern.permute.xlu0 0
        %627 = vperm.xlu0 %626, %v617
        %v628 = vpop.permute.xlu0 %627
        %631 = vset.pattern.permute.xlu0 0
        %632 = vperm.xlu0 %631, %v618
        %v633 = vpop.permute.xlu0 %632
        %636 = vset.pattern.permute.xlu0 0
        %637 = vperm.xlu0 %636, %v619
        %v638 = vpop.permute.xlu0 %637
        %vm640 = vcmask 130048
        %v642 = vsel %vm640, %v612, 0
        %v645 = vsel %vm640, %v613, 0
        %v648 = vsel %vm640, %v614, 0
        %v651 = vsel %vm640, %v615, 0
        %653 = vmatprep.subr.mxu0 0.0
        %654 = vmatpush1.msra.mxu0 0.0
        %655 = vmatprep.subr.mxu0 0.0
        %656 = vmatpush1.msra.mxu0 0.0
        %657 = vmatprep.subr.mxu0 0.0
        %658 = vmatpush1.msra.mxu0 0.0
        %659 = vmatprep.subr.mxu0 0.0
        %660 = vmatpush1.msra.mxu0 0.0
        %661 = vmatprep.subr.mxu0 0.0
        %662 = vmatpush1.msra.mxu0 0.0
        %663 = vmatprep.subr.mxu0 0.0
        %664 = vmatpush1.msra.mxu0 0.0
        %665 = vmatprep.subr.mxu0 0.0
        %666 = vmatpush1.msra.mxu0 0.0
        %667 = vmatprep.subr.mxu0 0.0
        %668 = vmatpush1.msra.mxu0 0.0
        %669 = vmatprep.subr.mxu0 0.0
        %670 = vmatpush1.msra.mxu0 0.0
        %671 = vmatprep.subr.mxu0 0.0
        %672 = vmatpush1.msra.mxu0 0.0
        %673 = vmatprep.subr.mxu0 0.0
        %674 = vmatpush1.msra.mxu0 0.0
        %675 = vmatprep.subr.mxu0 0.0
        %676 = vmatpush1.msra.mxu0 0.0
        %677 = vmatprep.subr.mxu0 0.0
        %678 = vmatpush1.msra.mxu0 0.0
        %679 = vmatprep.subr.mxu0 0.0
        %680 = vmatpush1.msra.mxu0 0.0
        %681 = vmatprep.subr.mxu0 0.0
        %682 = vmatpush1.msra.mxu0 %v278
        %683 = vmatprep.subr.mxu0 0.0
        %684 = vmatpush1.msra.mxu0 %v277
        %685 = vmatprep.subr.mxu0 0.0
        %686 = vmatpush2.msra.mxu0 0.0
        %687 = vmatprep.subr.mxu0 0.0
        %688 = vmatpush2.msra.mxu0 0.0
        %689 = vmatprep.subr.mxu0 0.0
        %690 = vmatpush2.msra.mxu0 0.0
        %691 = vmatprep.subr.mxu0 0.0
        %692 = vmatpush2.msra.mxu0 0.0
        %693 = vmatprep.subr.mxu0 0.0
        %694 = vmatpush2.msra.mxu0 0.0
        %695 = vmatprep.subr.mxu0 0.0
        %696 = vmatpush2.msra.mxu0 0.0
        %697 = vmatprep.subr.mxu0 0.0
        %698 = vmatpush2.msra.mxu0 0.0
        %699 = vmatprep.subr.mxu0 0.0
        %700 = vmatpush2.msra.mxu0 0.0
        %701 = vmatprep.subr.mxu0 0.0
        %702 = vmatpush2.msra.mxu0 0.0
        %703 = vmatprep.subr.mxu0 0.0
        %704 = vmatpush2.msra.mxu0 0.0
        %705 = vmatprep.subr.mxu0 0.0
        %706 = vmatpush2.msra.mxu0 0.0
        %707 = vmatprep.subr.mxu0 0.0
        %708 = vmatpush2.msra.mxu0 0.0
        %709 = vmatprep.subr.mxu0 0.0
        %710 = vmatpush2.msra.mxu0 0.0
        %711 = vmatprep.subr.mxu0 0.0
        %712 = vmatpush2.msra.mxu0 0.0
        %713 = vmatprep.subr.mxu0 0.0
        %714 = vmatpush2.msra.mxu0 0.0
        %715 = vmatprep.subr.mxu0 0.0
        %716 = vmatpush2.msra.mxu0 0.0
        %717 = vmatprep.mubr.f32.mxu0 0.0
        %718 = vmatmul.mubr.f32.gmra.mxu0 %v642
        %v719 = vpop.f32.mrf.mxu0
        %v720 = vadd.f32 %v623, %v719
        %v721 = vpop.f32.mrf.mxu0
        %722 = vmatprep.mubr.f32.mxu0 0.0
        %723 = vmatmul.mubr.f32.gmra.mxu0 %v645
        %v724 = vpop.f32.mrf.mxu0
        %v725 = vadd.f32 %v628, %v724
        %v726 = vpop.f32.mrf.mxu0
        %727 = vmatprep.mubr.f32.mxu0 0.0
        %728 = vmatmul.mubr.f32.gmra.mxu0 %v648
        %v729 = vpop.f32.mrf.mxu0
        %v730 = vadd.f32 %v633, %v729
        %v731 = vpop.f32.mrf.mxu0
        %732 = vmatprep.mubr.f32.mxu0 0.0
        %733 = vmatmul.mubr.f32.gmra.mxu0 %v651
        %v734 = vpop.f32.mrf.mxu0
        %v735 = vadd.f32 %v638, %v734
        %v736 = vpop.f32.mrf.mxu0
        %737 = vdwg.mxu0
        %v738 = vadd.f32 %v608, %v720
        %v739 = vadd.f32 %v609, %v725
        %v740 = vadd.f32 %v610, %v730
        %v741 = vadd.f32 %v611, %v735
        %vm742 = vcmask 261120
        %743 = vst.msk [vmem:[%s271] sm:$0xff] %vm742, %v738
        %744 = vst.msk [vmem:[%s271 + $0x8] sm:$0xff] %vm742, %v739
        %745 = vst.msk [vmem:[%s271 + $0x10] sm:$0xff] %vm742, %v740
        %746 = vst.msk [vmem:[%s271 + $0x18] sm:$0xff] %vm742, %v741
        %s747 = sand.u32 %s181, 1
        %s748 = scalar_lea.sflag [#allocation3], %s747
        %s749 = sand.u32 %s181, 1
        %s750 = smul.addr %s749, 32
        %s751 = scalar_lea.vmem [#allocation2], %s750
        // Predicated region
        $region49: #{tcn_block.1} parent=47 // pred_check
          %p752 = pneg %p191
        $region50: #{tcn_block.1} parent=47 // pred_check_branch
          %754 = sbr.rel (%p752) target = $region52
        $region51: #{tcn_block.1} parent=47 // pred_region
          %s756 = ssub.s32 512, 512
          %757 = vsyncadd %s748, %s756
          %s758 = smul.addr %s21, 4
          %s759 = smul.addr %s758, 128
          %s760 = scalar_lea.hbm %s7, %s759
          %s761 = sshll.u32 %s751, 4
          %s762 = int_to_ptr.vmem [resolvable:$true] %s761
          %767 = dma.vmem_to_hbm [thread:$0]  %s762, 512, %s760, %s748, 128, 128, 8
        $region52: #{tcn_block.1} parent=47 // pred_fallthru
          _
      $region48: #{tcn_block.1} parent=5 // pred_fallthru
        _
      %p768 = scmp.le.s32.totalorder 2, %s16
      // Predicated region
      $region53: #{tcn_block.1} parent=5 // pred_check
        %p769 = pneg %p768
      $region54: #{tcn_block.1} parent=5 // pred_check_branch
        %771 = sbr.rel (%p769) target = $region56
      $region55: #{tcn_block.1} parent=5 // pred_region
        %s772 = ssub.s32 %s16, 2
        // Predicated region
        $region57: #{tcn_block.1} parent=55 // pred_check
          %p773 = pneg %p197
        $region58: #{tcn_block.1} parent=55 // pred_check_branch
          %775 = sbr.rel (%p773) target = $region60
        $region59: #{tcn_block.1} parent=55 // pred_region
          %s776 = sand.u32 %s182, 1
          %s777 = scalar_lea.sflag [#allocation3], %s776
          %s778 = sand.u32 %s182, 1
          %s779 = smul.addr %s778, 32
          %s780 = scalar_lea.vmem [#allocation2], %s779
          %781 = dma.done %s777, 512
        $region60: #{tcn_block.1} parent=55 // pred_fallthru
          _
      $region56: #{tcn_block.1} parent=5 // pred_fallthru
        _
    $region6: #{tcn_block.1} parent=1 // loop_footer
      %s20 = sadd.s32 1, %s16
    $region7: #{tcn_block.1} parent=1 // loop_footer_branch
      %15 = sbr.rel target = $region3
    $region8: #{tcn_block.1} parent=1 // loop_exit
      _
    %782 = vsyncpa [#allocation3], 1
    %s783 = scalar_lea.sflag [#allocation3], 1
    %784 = vsyncpa %s783, 1

</llo_original>
